<compile_context>
chip_gen: v6e
topology: v6e:2x2x1
jax: 0.10.0
libtpu: 0.0.40
codegen_flags: <defaults>
</compile_context>

<pallas_src>
import functools

import jax
import jax.numpy as jnp
from jax import lax
from jax.experimental import pallas as pl
from jax.experimental.pallas import tpu as pltpu

_SUBLANE = 8
_LANE = 128

# Conservative per-TensorCore budgets: safe on v5e (16 MiB scoped default),
# v6e (128 MiB physical) and v7x (64 MiB per TC).
_FAST_PATH_WEIGHT_BYTES = 12 * 1024 * 1024   # resident-weight cap
_FAST_PATH_VMEM_BUDGET = 24 * 1024 * 1024    # weight + double-buffered x/out tiles
_FAST_PATH_VMEM_LIMIT = 28 * 1024 * 1024     # vmem_limit_bytes for the fast path


def _round_up(v, m):
    return ((v + m - 1) // m) * m


def _cdiv(a, b):
    return -(-a // b)


def _pick_tm(n_rows, target):
    """Balanced row tile: multiple of 8, or == n_rows when a single tile fits."""
    target = max(int(target), _SUBLANE)
    if n_rows <= target:
        return n_rows                       # equals full array dim -> always legal
    num_tiles = _cdiv(n_rows, target)
    return _round_up(_cdiv(n_rows, num_tiles), _SUBLANE)


# --------------------------------------------------------------------------
# Kernels
# --------------------------------------------------------------------------
def _linear_resident_kernel(x_ref, w_ref, b_ref, o_ref):
    """Fast path: full weight resident in VMEM, 1-D grid over row tiles.

    x_ref: (tm, F)  activation row tile
    w_ref: (F, O)   whole transposed weight (constant index_map -> DMA'd once)
    b_ref: (1, O)   bias
    o_ref: (tm, O)  output row tile
    """
    acc = jnp.dot(x_ref[...], w_ref[...], preferred_element_type=jnp.float32)
    o_ref[...] = (acc + b_ref[...].astype(jnp.float32)).astype(o_ref.dtype)


def _linear_tiled_kernel(x_ref, w_ref, b_ref, o_ref, acc_ref, *,
                         in_features, tk):
    """Fallback: (M, N, K) grid with a float32 VMEM accumulator.

    x_ref:   (tm, tk) activation tile (ragged K tail masked in-kernel)
    w_ref:   (tk, tn) transposed weight tile (zero-padded along K at prep time)
    b_ref:   (1, tn)  bias tile (folded into the accumulator init)
    o_ref:   (tm, tn) output tile
    acc_ref: (tm, tn) float32 accumulator
    """
    k = pl.program_id(2)

    @pl.when(k == 0)
    def _():
        # Fold the bias into the accumulator init; finalize is then just a cast.
        acc_ref[...] = jnp.broadcast_to(
            b_ref[...].astype(jnp.float32), acc_ref.shape)

    x = x_ref[...]
    if in_features % tk != 0:
        # x is NOT padded along K in HBM; the boundary K block may contain
        # garbage lanes (possibly NaN) beyond `in_features`, so zero them
        # explicitly.  One VPU select per tile - the MXU/DMA bound this
        # kernel, so the VPU has slack.
        col = lax.broadcasted_iota(jnp.int32, x.shape, 1) + k * tk
        x = jnp.where(col < in_features, x, jnp.zeros_like(x))

    acc_ref[...] += jnp.dot(x, w_ref[...], preferred_element_type=jnp.float32)

    @pl.when(k == pl.num_programs(2) - 1)
    def _():
        o_ref[...] = acc_ref[...].astype(o_ref.dtype)


# --------------------------------------------------------------------------
# Wrapper
# --------------------------------------------------------------------------
def prepare_linear_params(weight, bias, *, force_tiled=False):
    """One-time per-layer prep (hoisted out of the per-call hot path).

    weight: (O, F) exactly as nn.Linear stores it; bias: (O,).
    Transposes the weight once to (F, O) so the kernel uses the canonical
    ((1,),(0,)) MXU contraction with no in-kernel relayout, and (fallback
    path only) zero-pads it along F so the reduction grid divides exactly.
    Cache / reuse the returned dict for every forward call of the layer.
    """
    O, F = weight.shape
    w_t = jnp.transpose(weight)            # (F, O)
    b2 = bias.reshape(1, O)
    w_bytes = F * O * jnp.dtype(weight.dtype).itemsize
    fast = (not force_tiled) and (w_bytes <= _FAST_PATH_WEIGHT_BYTES)
    params = {"in_features": F, "out_features": O, "fast": fast, "b": b2}
    if fast:
        params["w"] = w_t
    else:
        tk = F if F <= 512 else 512
        f_pad = _round_up(F, tk)
        if f_pad != F:
            w_t = jnp.pad(w_t, ((0, f_pad - F), (0, 0)))
        params["w"] = w_t
        params["tk"] = tk
    return params


def pallas_linear(x_flat, params):
    """y = x_flat @ weight.T + bias (PyTorch nn.Linear semantics)."""
    N, F = x_flat.shape
    assert F == params["in_features"], "feature dim mismatch"
    O = params["out_features"]
    out_dtype = x_flat.dtype
    w, b = params["w"], params["b"]

    if params["fast"]:
        # ------------- weight-resident fast path: 1-D grid over rows -------
        x_item = jnp.dtype(x_flat.dtype).itemsize
        o_item = jnp.dtype(out_dtype).itemsize
        w_bytes = (w.size * jnp.dtype(w.dtype).itemsize
                   + b.size * jnp.dtype(b.dtype).itemsize)
        per_row = 2 * F * x_item + 2 * O * o_item     # double-buffered streams
        tm_cap = max((_FAST_PATH_VMEM_BUDGET - w_bytes) // max(per_row, 1),
                     _SUBLANE)
        target = min(1024, max((tm_cap // _SUBLANE) * _SUBLANE, _SUBLANE))
        tm = _pick_tm(N, target)

        return pl.pallas_call(
            _linear_resident_kernel,
            out_shape=jax.ShapeDtypeStruct((N, O), out_dtype),
            grid_spec=pltpu.PrefetchScalarGridSpec(
                num_scalar_prefetch=0,
                grid=(pl.cdiv(N, tm),),
                in_specs=[
                    pl.BlockSpec((tm, F), lambda i: (i, 0)),
                    pl.BlockSpec((F, O), lambda i: (0, 0)),   # resident weight
                    pl.BlockSpec((1, O), lambda i: (0, 0)),   # resident bias
                ],
                out_specs=pl.BlockSpec((tm, O), lambda i: (i, 0)),
            ),
            compiler_params=pltpu.CompilerParams(
                dimension_semantics=("parallel",),
                vmem_limit_bytes=_FAST_PATH_VMEM_LIMIT,
            ),
        )(x_flat, w, b)

    # ----------------- K-tiled fallback for very large layers --------------
    tk = params["tk"]
    f_pad = w.shape[0]                       # weight pre-padded along F
    tm = _pick_tm(N, 512)
    tn = O if O <= 512 else 512
    grid = (pl.cdiv(N, tm), pl.cdiv(O, tn), f_pad // tk)

    kernel = functools.partial(_linear_tiled_kernel, in_features=F, tk=tk)
    return pl.pallas_call(
        kernel,
        out_shape=jax.ShapeDtypeStruct((N, O), out_dtype),
        grid_spec=pltpu.PrefetchScalarGridSpec(
            num_scalar_prefetch=0,
            grid=grid,
            in_specs=[
                pl.BlockSpec((tm, tk), lambda i, j, k: (i, k)),
                pl.BlockSpec((tk, tn), lambda i, j, k: (k, j)),
                pl.BlockSpec((1, tn), lambda i, j, k: (0, j)),
            ],
            out_specs=pl.BlockSpec((tm, tn), lambda i, j, k: (i, j)),
            scratch_shapes=[pltpu.VMEM((tm, tn), jnp.float32)],
        ),
        compiler_params=pltpu.CompilerParams(
            dimension_semantics=("parallel", "parallel", "arbitrary"),
        ),
    )(x_flat, w, b)


def time_distributed_forward(x, params, *, batch_first=False):
    """Reproduces TimeDistributed_wrapper.forward with an inner Linear."""
    if x.ndim <= 2:
        # <=2D input: apply the module directly.
        x2 = x if x.ndim == 2 else x.reshape(1, -1)
        y = pallas_linear(x2, params)
        return y if x.ndim == 2 else y.reshape(-1)

    # x_reshape = x.contiguous().view(-1, x.size(-1))
    x_flat = x.reshape(-1, x.shape[-1])
    y = pallas_linear(x_flat, params)
    out_f = y.shape[-1]
    if batch_first:
        # y.view(x.size(0), -1, y.size(-1))
        return y.reshape(x.shape[0], -1, out_f)
    # y.view(-1, x.size(1), y.size(-1))
    return y.reshape(-1, x.shape[1], out_f)


# --------------------------------------------------------------------------
# Demo / self-check
# --------------------------------------------------------------------------
if __name__ == "__main__":
    key = jax.random.PRNGKey(0)
    keys = jax.random.split(key, 9)

    # --- 1) Demo shapes consistent with the module: seq=8, batch=2, hidden=32.
    seq, batch, in_f, out_f = 8, 2, 32, 32
    x = jax.random.normal(keys[0], (seq, batch, in_f), dtype=jnp.float32)
    bound = 1.0 / (in_f ** 0.5)
    w = jax.random.uniform(keys[1], (out_f, in_f), jnp.float32, -bound, bound)
    b = jax.random.uniform(keys[2], (out_f,), jnp.float32, -bound, bound)
    params = prepare_linear_params(w, b)       # one-time, hoisted out of forward
    y = time_distributed_forward(x, params, batch_first=False)
    jax.block_until_ready(y)
    y_ref = (x.reshape(-1, in_f) @ w.T + b).reshape(-1, batch, out_f)
    assert y.shape == (seq, batch, out_f)
    assert jnp.allclose(y, y_ref, atol=1e-5, rtol=1e-5)

    # --- 2) Ragged shapes (N, F, O not 8/128-aligned): boundary-block handling.
    s2, b2_, f2, o2 = 5, 3, 40, 48
    x2 = jax.random.normal(keys[3], (s2, b2_, f2), dtype=jnp.float32)
    bnd2 = 1.0 / (f2 ** 0.5)
    w2 = jax.random.uniform(keys[4], (o2, f2), jnp.float32, -bnd2, bnd2)
    bb2 = jax.random.uniform(keys[5], (o2,), jnp.float32, -bnd2, bnd2)
    p2 = prepare_linear_params(w2, bb2)
    y2 = time_distributed_forward(x2, p2, batch_first=False)
    jax.block_until_ready(y2)
    y2_ref = (x2.reshape(-1, f2) @ w2.T + bb2).reshape(-1, b2_, o2)
    assert y2.shape == (s2, b2_, o2)
    assert jnp.allclose(y2, y2_ref, atol=1e-5, rtol=1e-5)

    # --- 3) Force the K-tiled fallback: multi-step K with ragged tail masking,
    #        bias folded into accumulator init, batch_first=True reshape.
    s3, b3, f3, o3 = 10, 5, 640, 96
    x3 = jax.random.normal(keys[6], (s3, b3, f3), dtype=jnp.float32)
    bnd3 = 1.0 / (f3 ** 0.5)
    w3 = jax.random.uniform(keys[7], (o3, f3), jnp.float32, -bnd3, bnd3)
    bb3 = jax.random.uniform(keys[8], (o3,), jnp.float32, -bnd3, bnd3)
    p3 = prepare_linear_params(w3, bb3, force_tiled=True)
    y3 = time_distributed_forward(x3, p3, batch_first=True)
    jax.block_until_ready(y3)
    y3_ref = (x3.reshape(-1, f3) @ w3.T + bb3).reshape(s3, -1, o3)
    assert y3.shape == (s3, b3, o3)
    # Looser tolerance: different K-accumulation order vs the single-pass ref.
    assert jnp.allclose(y3, y3_ref, atol=1e-2, rtol=1e-2)

    print("KERNEL_OK")
</pallas_src>

<mosaic_0001>
module attributes {stable_mosaic.version = 11 : i64} {
  func.func @_linear_resident_kernel(%arg0: i32, %arg1: memref<16x32xf32, #tpu.memory_space<vmem>>, %arg2: memref<32x32xf32, #tpu.memory_space<vmem>>, %arg3: memref<1x32xf32, #tpu.memory_space<vmem>>, %arg4: memref<16x32xf32, #tpu.memory_space<vmem>>) attributes {dimension_semantics = [#tpu.dimension_semantics<parallel>], iteration_bounds = array<i64: 1>, scalar_prefetch = 0 : i64, scratch_operands = 0 : i64, tpu.core_type = #tpu.core_type<tc>, window_params = [{transform_indices = @transform_0, window_bounds = array<i64: 16, 32>}, {pipeline_mode = #tpu.pipeline_mode<synchronous>, transform_indices = @transform_1, window_bounds = array<i64: 32, 32>}, {pipeline_mode = #tpu.pipeline_mode<synchronous>, transform_indices = @transform_2, window_bounds = array<i64: 1, 32>}, {transform_indices = @transform_3, window_bounds = array<i64: 16, 32>}]} {
    %c0 = arith.constant 0 : index
    %c0_0 = arith.constant 0 : index
    %0 = vector.load %arg1[%c0, %c0_0] : memref<16x32xf32, #tpu.memory_space<vmem>>, vector<16x32xf32>
    %c0_1 = arith.constant 0 : index
    %c0_2 = arith.constant 0 : index
    %1 = vector.load %arg2[%c0_1, %c0_2] : memref<32x32xf32, #tpu.memory_space<vmem>>, vector<32x32xf32>
    %cst = arith.constant dense<0.000000e+00> : vector<16x32xf32>
    %2 = tpu.matmul %0, %1, %cst {dimension_numbers = #tpu.dot_dimension_numbers<[1], [0], [0], [1], [0, 0, 1, 1], [], []>} : vector<16x32xf32>, vector<32x32xf32>, vector<16x32xf32> -> vector<16x32xf32>
    %c0_3 = arith.constant 0 : index
    %c0_4 = arith.constant 0 : index
    %3 = vector.load %arg3[%c0_3, %c0_4] : memref<1x32xf32, #tpu.memory_space<vmem>>, vector<1x32xf32>
    %4 = vector.broadcast %3 : vector<1x32xf32> to vector<16x32xf32>
    %5 = arith.addf %2, %4 : vector<16x32xf32>
    %c0_5 = arith.constant 0 : index
    %c0_6 = arith.constant 0 : index
    %6 = vector.load %arg4[%c0_5, %c0_6] : memref<16x32xf32, #tpu.memory_space<vmem>>, vector<16x32xf32>
    tpu.vector_store %arg4[%c0_5, %c0_6], %5 {strides = array<i32>} : memref<16x32xf32, #tpu.memory_space<vmem>>, vector<16x32xf32>,
    return
  }
  func.func @transform_0(%arg0: i32) -> (i32, i32) {
    %c0_i32 = arith.constant 0 : i32
    %c0_i32_0 = arith.constant 0 : i32
    return %arg0, %c0_i32 : i32, i32
  }
  func.func @transform_1(%arg0: i32) -> (i32, i32) {
    %c0_i32 = arith.constant 0 : i32
    %c0_i32_0 = arith.constant 0 : i32
    %c0_i32_1 = arith.constant 0 : i32
    return %c0_i32, %c0_i32_0 : i32, i32
  }
  func.func @transform_2(%arg0: i32) -> (i32, i32) {
    %c0_i32 = arith.constant 0 : i32
    %c0_i32_0 = arith.constant 0 : i32
    %c0_i32_1 = arith.constant 0 : i32
    return %c0_i32, %c0_i32_0 : i32, i32
  }
  func.func @transform_3(%arg0: i32) -> (i32, i32) {
    %c0_i32 = arith.constant 0 : i32
    %c0_i32_0 = arith.constant 0 : i32
    return %arg0, %c0_i32 : i32, i32
  }
}

</mosaic_0001>

<llo_original>
// kernel: tpu_custom_call.1
$region0: #{tpu_custom_call.1}
  #allocation0 [shape = 'u32[]', space=smem, size = 0x4, offset = 0x4, fixed_abs, tag = 'smem constant byte address 0x4 - core index']
  #allocation1 [shape = 'u32[144,128]{1,0:T(1,128)}', space=vmem, size = 0x12000, scoped, tag = 'internal scratch']
  %s0 = inlined_call_operand.hbm [shape: f32[16,32], index: 0, kind: input, shape index: {}]
  %s1 = inlined_call_operand.hbm [shape: f32[32,32], index: 1, kind: input, shape index: {}]
  %s2 = inlined_call_operand.vmem [shape: f32[1,32], index: 2, kind: input, shape index: {}]
  %s3 = inlined_call_operand.hbm [shape: f32[16,32], index: 3, kind: output, shape index: {}]
  %s4 = sld [smem:[#allocation0]]
  $region30: #{tpu_custom_call.1} parent=0
    _
  %s6 = ssub.s32 1, %s4
  %s7 = scalar_select 0, %s6, %s4
  $region1: #{tpu_custom_call.1} parent=0
    #allocation2 [shape = 'u8[8192]{0}', space=vmem, size = 0x2000, scoped, tag = 'input window, operand 0, single buffered']
    #allocation3 [shape = 's32[1]{0}', space=sflag, size = 0x4, scoped, tag = 'scoped memory for tpu_custom_call.1']
    #allocation4 [shape = 's32[1]{0}', space=sflag, size = 0x4, scoped, tag = 'scoped memory for tpu_custom_call.1']
    #allocation5 [shape = 'u8[16384]{0}', space=vmem, size = 0x4000, scoped, tag = 'input window, operand 1, single buffered']
    #allocation6 [shape = 's32[1]{0}', space=sflag, size = 0x4, scoped, tag = 'scoped memory for tpu_custom_call.1']
    #allocation7 [shape = 'u8[8192]{0}', space=vmem, size = 0x2000, scoped, tag = 'output window, operand 0, single buffered']
    %8 = vsyncpa [#allocation3], 0
    %9 = vsyncpa [#allocation6], 0
    %10 = vsyncpa [#allocation4], 0
    // Predicated region
    $region2: #{tpu_custom_call.1} parent=1 // pred_check
      _
    $region3: #{tpu_custom_call.1} parent=1 // pred_check_branch
      %12 = sbr.rel (0) target = $region5
    $region4: #{tpu_custom_call.1} parent=1 // pred_region
      %s14 = ssub.s32 256, 256
      %15 = vsyncadd [#allocation3], %s14
      %s16 = sshll.u32 [#allocation2], 4
      %s17 = int_to_ptr.vmem [resolvable:$true] %s16
      %22 = dma.hbm_to_vmem [thread:$0]  %s0, 256, %s17, [#allocation3], 128, 128, 8
    $region5: #{tpu_custom_call.1} parent=1 // pred_fallthru
      _
    // Predicated region
    $region6: #{tpu_custom_call.1} parent=1 // pred_check
      _
    $region7: #{tpu_custom_call.1} parent=1 // pred_check_branch
      %24 = sbr.rel (0) target = $region9
    $region8: #{tpu_custom_call.1} parent=1 // pred_region
      %s26 = ssub.s32 512, 512
      %27 = vsyncadd [#allocation6], %s26
      %s28 = sshll.u32 [#allocation5], 4
      %s29 = int_to_ptr.vmem [resolvable:$true] %s28
      %34 = dma.hbm_to_vmem [thread:$0]  %s1, 512, %s29, [#allocation6], 128, 128, 8
    $region9: #{tpu_custom_call.1} parent=1 // pred_fallthru
      _
    // Predicated region
    $region10: #{tpu_custom_call.1} parent=1 // pred_check
      _
    $region11: #{tpu_custom_call.1} parent=1 // pred_check_branch
      %36 = sbr.rel (0) target = $region13
    $region12: #{tpu_custom_call.1} parent=1 // pred_region
      _
    $region13: #{tpu_custom_call.1} parent=1 // pred_fallthru
      _
    // Predicated region
    $region14: #{tpu_custom_call.1} parent=1 // pred_check
      _
    $region15: #{tpu_custom_call.1} parent=1 // pred_check_branch
      %38 = sbr.rel (0) target = $region17
    $region16: #{tpu_custom_call.1} parent=1 // pred_region
      %39 = dma.done [#allocation3], 256
    $region17: #{tpu_custom_call.1} parent=1 // pred_fallthru
      _
    // Predicated region
    $region18: #{tpu_custom_call.1} parent=1 // pred_check
      _
    $region19: #{tpu_custom_call.1} parent=1 // pred_check_branch
      %41 = sbr.rel (0) target = $region21
    $region20: #{tpu_custom_call.1} parent=1 // pred_region
      %42 = dma.done [#allocation6], 512
    $region21: #{tpu_custom_call.1} parent=1 // pred_fallthru
      _
    %v43 = vld [vmem:[#allocation2] sm:$0xff]
    %v44 = vld [vmem:[#allocation2 + $0x8] sm:$0xff]
    %v45 = vld [vmem:[#allocation5] sm:$0xff]
    %v46 = vld [vmem:[#allocation5 + $0x8] sm:$0xff]
    %v47 = vld [vmem:[#allocation5 + $0x10] sm:$0xff]
    %v48 = vld [vmem:[#allocation5 + $0x18] sm:$0xff]
    %v49 = vld [vmem:[%s2] sm:$0x1]
    %v51 = vlaneseq
    %v52 = vshrl.u32 %v51, 7
    %v53 = vsub.s32 0, %v52
    %v54 = vrot.slane %v49, %v53
    %vm56 = vcmask 261120
    %v58 = vsel %vm56, %v43, 0
    %v61 = vsel %vm56, %v44, 0
    %63 = vmatprep.subr.mxu0 0.0
    %64 = vmatpush1.msra.mxu0 0.0
    %65 = vmatprep.subr.mxu0 0.0
    %66 = vmatpush1.msra.mxu0 0.0
    %67 = vmatprep.subr.mxu0 0.0
    %68 = vmatpush1.msra.mxu0 0.0
    %69 = vmatprep.subr.mxu0 0.0
    %70 = vmatpush1.msra.mxu0 0.0
    %71 = vmatprep.subr.mxu0 0.0
    %72 = vmatpush1.msra.mxu0 0.0
    %73 = vmatprep.subr.mxu0 0.0
    %74 = vmatpush1.msra.mxu0 0.0
    %75 = vmatprep.subr.mxu0 0.0
    %76 = vmatpush1.msra.mxu0 0.0
    %77 = vmatprep.subr.mxu0 0.0
    %78 = vmatpush1.msra.mxu0 0.0
    %79 = vmatprep.subr.mxu0 0.0
    %80 = vmatpush1.msra.mxu0 0.0
    %81 = vmatprep.subr.mxu0 0.0
    %82 = vmatpush1.msra.mxu0 0.0
    %83 = vmatprep.subr.mxu0 0.0
    %84 = vmatpush1.msra.mxu0 0.0
    %85 = vmatprep.subr.mxu0 0.0
    %86 = vmatpush1.msra.mxu0 0.0
    %87 = vmatprep.subr.mxu0 0.0
    %88 = vmatpush1.msra.mxu0 %v48
    %89 = vmatprep.subr.mxu0 0.0
    %90 = vmatpush1.msra.mxu0 %v47
    %91 = vmatprep.subr.mxu0 0.0
    %92 = vmatpush1.msra.mxu0 %v46
    %93 = vmatprep.subr.mxu0 0.0
    %94 = vmatpush1.msra.mxu0 %v45
    %95 = vmatprep.subr.mxu0 0.0
    %96 = vmatpush2.msra.mxu0 0.0
    %97 = vmatprep.subr.mxu0 0.0
    %98 = vmatpush2.msra.mxu0 0.0
    %99 = vmatprep.subr.mxu0 0.0
    %100 = vmatpush2.msra.mxu0 0.0
    %101 = vmatprep.subr.mxu0 0.0
    %102 = vmatpush2.msra.mxu0 0.0
    %103 = vmatprep.subr.mxu0 0.0
    %104 = vmatpush2.msra.mxu0 0.0
    %105 = vmatprep.subr.mxu0 0.0
    %106 = vmatpush2.msra.mxu0 0.0
    %107 = vmatprep.subr.mxu0 0.0
    %108 = vmatpush2.msra.mxu0 0.0
    %109 = vmatprep.subr.mxu0 0.0
    %110 = vmatpush2.msra.mxu0 0.0
    %111 = vmatprep.subr.mxu0 0.0
    %112 = vmatpush2.msra.mxu0 0.0
    %113 = vmatprep.subr.mxu0 0.0
    %114 = vmatpush2.msra.mxu0 0.0
    %115 = vmatprep.subr.mxu0 0.0
    %116 = vmatpush2.msra.mxu0 0.0
    %117 = vmatprep.subr.mxu0 0.0
    %118 = vmatpush2.msra.mxu0 0.0
    %119 = vmatprep.subr.mxu0 0.0
    %120 = vmatpush2.msra.mxu0 0.0
    %121 = vmatprep.subr.mxu0 0.0
    %122 = vmatpush2.msra.mxu0 0.0
    %123 = vmatprep.subr.mxu0 0.0
    %124 = vmatpush2.msra.mxu0 0.0
    %125 = vmatprep.subr.mxu0 0.0
    %126 = vmatpush2.msra.mxu0 0.0
    %127 = vmatprep.mubr.f32.mxu0 0.0
    %128 = vmatmul.mubr.f32.gmra.mxu0 %v58
    %v129 = vpop.f32.mrf.mxu0
    %v130 = vadd.f32 %v54, %v129
    %v131 = vpop.f32.mrf.mxu0
    %132 = vmatprep.mubr.f32.mxu0 0.0
    %133 = vmatmul.mubr.f32.gmra.mxu0 %v61
    %v134 = vpop.f32.mrf.mxu0
    %v135 = vadd.f32 %v54, %v134
    %v136 = vpop.f32.mrf.mxu0
    %137 = vdwg.mxu0
    %138 = vst.msk [vmem:[#allocation7] sm:$0xff] %vm56, %v130
    %139 = vst.msk [vmem:[#allocation7 + $0x8] sm:$0xff] %vm56, %v135
    // Predicated region
    $region22: #{tpu_custom_call.1} parent=1 // pred_check
      _
    $region23: #{tpu_custom_call.1} parent=1 // pred_check_branch
      %141 = sbr.rel (0) target = $region25
    $region24: #{tpu_custom_call.1} parent=1 // pred_region
      %s143 = ssub.s32 256, 256
      %144 = vsyncadd [#allocation4], %s143
      %s145 = sshll.u32 [#allocation7], 4
      %s146 = int_to_ptr.vmem [resolvable:$true] %s145
      %151 = dma.vmem_to_hbm [thread:$0]  %s146, 256, %s3, [#allocation4], 128, 128, 8
    $region25: #{tpu_custom_call.1} parent=1 // pred_fallthru
      _
    // Predicated region
    $region26: #{tpu_custom_call.1} parent=1 // pred_check
      _
    $region27: #{tpu_custom_call.1} parent=1 // pred_check_branch
      %153 = sbr.rel (0) target = $region29
    $region28: #{tpu_custom_call.1} parent=1 // pred_region
      %154 = dma.done [#allocation4], 256
    $region29: #{tpu_custom_call.1} parent=1 // pred_fallthru
      _
    %155 = vsyncpa [#allocation3], 1
    %156 = vsyncpa [#allocation6], 1
    %157 = vsyncpa [#allocation4], 1

</llo_original>
